<compile_context>
chip_gen: v5e
topology: v5e:2x2
jax: 0.10.0
libtpu: 0.0.40
codegen_flags: <defaults>
</compile_context>

<pallas_src>
import numpy as np
import jax
import jax.numpy as jnp
from jax.experimental import pallas as pl
from jax.experimental.pallas import tpu as pltpu


def _pos_enc_kernel(x_ref, f_ref, p_ref, o_ref):
    """One (tb, dim) -> (tb, out_dim) tile: MXU scale/replicate + fused sin."""
    x = x_ref[...].astype(jnp.float32)                       # (tb, dim)
    # z[:, o*dim + d] = 2**o * x[:, d]  (and the same for the cos half).
    z = jnp.dot(x, f_ref[...],
                preferred_element_type=jnp.float32,
                precision=jax.lax.Precision.HIGHEST)         # (tb, out_dim)
    # cos(z) == sin(z + pi/2): single lane-dense transcendental.
    o_ref[...] = jnp.sin(z + p_ref[...]).astype(o_ref.dtype)


def _freq_phase(num_octaves: int, dim: int):
    """Trace-time constant (dim, out_dim) replication/scale matrix and phase row."""
    out_dim = 2 * num_octaves * dim
    F = np.zeros((dim, out_dim), dtype=np.float32)
    for o in range(num_octaves):
        f = float(2 ** o)
        for d in range(dim):
            F[d, o * dim + d] = f                      # sin half
            F[d, (num_octaves + o) * dim + d] = f      # cos half
    phase = np.zeros((1, out_dim), dtype=np.float32)
    phase[0, num_octaves * dim:] = np.pi / 2.0
    return F, phase


def positional_encoding(samples: jax.Array, num_octaves: int,
                        *, out_dtype=None,
                        block_rows: int | None = None) -> jax.Array:
    """JAX/Pallas equivalent of PositionalEncoding(num_octaves).forward(samples)."""
    *batch_dims, dim = samples.shape
    out_dim = 2 * num_octaves * dim
    if out_dtype is None:
        out_dtype = samples.dtype

    x2d = samples.reshape(-1, dim)                    # keep native dtype in HBM
    rows = x2d.shape[0]

    in_itemsize = jnp.dtype(x2d.dtype).itemsize
    out_itemsize = jnp.dtype(out_dtype).itemsize
    lane_pad = lambda d: ((d + 127) // 128) * 128

    # Per-row VMEM footprint of one grid block: lane-padded input block,
    # lane-padded output block, plus the f32 intermediate z.
    bytes_per_row = (lane_pad(dim) * max(in_itemsize, 4)
                     + lane_pad(out_dim) * (out_itemsize + 4))

    # Conservative budget for the double-buffered in+out blocks (safe on v7x's
    # 64 MiB physical VMEM as well as v5e/v6e's 128 MiB).
    vmem_block_budget = 24 * 1024 * 1024
    tb = block_rows
    if tb is None:
        tb = vmem_block_budget // (2 * bytes_per_row)
        tb = min(tb, 2048)
        # Keep >= ~8 grid blocks when rows permit, so both v7x TensorCores get
        # work and output writeback overlaps compute.
        if rows >= 8 * 8:
            tb = min(tb, max(8, ((rows // 8) // 8) * 8))
    rows8 = ((rows + 7) // 8) * 8
    tb = max(8, min((tb // 8) * 8, rows8))

    grid = (pl.cdiv(rows, tb),)   # ragged last block handled by Pallas masking

    F_np, phase_np = _freq_phase(num_octaves, dim)
    F = jnp.asarray(F_np)
    phase = jnp.asarray(phase_np)

    cost = pl.CostEstimate(
        flops=2 * rows * dim * out_dim + rows * out_dim,
        transcendentals=rows * out_dim,
        bytes_accessed=in_itemsize * rows * dim + out_itemsize * rows * out_dim,
    )

    out2d = pl.pallas_call(
        _pos_enc_kernel,
        out_shape=jax.ShapeDtypeStruct((rows, out_dim), out_dtype),
        grid_spec=pltpu.PrefetchScalarGridSpec(
            num_scalar_prefetch=0,
            grid=grid,
            in_specs=[
                pl.BlockSpec((tb, dim), lambda i: (i, 0)),        # x tile
                pl.BlockSpec((dim, out_dim), lambda i: (0, 0)),   # F (resident)
                pl.BlockSpec((1, out_dim), lambda i: (0, 0)),     # phase (resident)
            ],
            out_specs=pl.BlockSpec((tb, out_dim), lambda i: (i, 0)),
        ),
        compiler_params=pltpu.CompilerParams(
            dimension_semantics=("parallel",),
            vmem_limit_bytes=48 * 1024 * 1024,
        ),
        cost_estimate=cost,
    )(x2d, F, phase)

    return out2d.reshape(*batch_dims, out_dim)


def _reference(samples, num_octaves):
    freqs = [2 ** i for i in range(num_octaves)]
    enc = [jnp.sin(f * samples) for f in freqs] + [jnp.cos(f * samples) for f in freqs]
    return jnp.concatenate(enc, axis=-1)


if __name__ == "__main__":
    num_octaves = 4

    # Primary case: *batch = (2, 4), dim = 16 -> out_dim = 2*4*16 = 128 (lane-dense).
    key = jax.random.PRNGKey(0)
    x = jax.random.uniform(key, (2, 4, 16), dtype=jnp.float32)
    out = jax.block_until_ready(positional_encoding(x, num_octaves))
    ref = _reference(x, num_octaves)
    assert out.shape == (2, 4, 2 * num_octaves * 16), out.shape
    assert jnp.allclose(out, ref, atol=2e-5, rtol=2e-5), "mismatch vs reference (primary)"

    # Secondary case: ragged row count (200 rows, block_rows=64 -> 4 grid blocks,
    # partial last block) to exercise the no-pad tiling path.
    x2 = jax.random.normal(jax.random.PRNGKey(1), (200, 16), dtype=jnp.float32)
    out2 = jax.block_until_ready(positional_encoding(x2, num_octaves, block_rows=64))
    ref2 = _reference(x2, num_octaves)
    assert out2.shape == (200, 2 * num_octaves * 16), out2.shape
    assert jnp.allclose(out2, ref2, atol=2e-5, rtol=2e-5), "mismatch vs reference (ragged)"

    print("KERNEL_OK")
</pallas_src>

<mosaic_0001>
module attributes {stable_mosaic.version = 11 : i64} {
  func.func @_pos_enc_kernel(%arg0: i32, %arg1: memref<8x16xf32, #tpu.memory_space<vmem>>, %arg2: memref<16x128xf32, #tpu.memory_space<vmem>>, %arg3: memref<1x128xf32, #tpu.memory_space<vmem>>, %arg4: memref<8x128xf32, #tpu.memory_space<vmem>>) attributes {dimension_semantics = [#tpu.dimension_semantics<parallel>], iteration_bounds = array<i64: 1>, scalar_prefetch = 0 : i64, scratch_operands = 0 : i64, tpu.core_type = #tpu.core_type<tc>, window_params = [{transform_indices = @transform_0, window_bounds = array<i64: 8, 16>}, {pipeline_mode = #tpu.pipeline_mode<synchronous>, transform_indices = @transform_1, window_bounds = array<i64: 16, 128>}, {pipeline_mode = #tpu.pipeline_mode<synchronous>, transform_indices = @transform_2, window_bounds = array<i64: 1, 128>}, {transform_indices = @transform_3, window_bounds = array<i64: 8, 128>}]} {
    %c0 = arith.constant 0 : index
    %c0_0 = arith.constant 0 : index
    %0 = vector.load %arg1[%c0, %c0_0] : memref<8x16xf32, #tpu.memory_space<vmem>>, vector<8x16xf32>
    %c0_1 = arith.constant 0 : index
    %c0_2 = arith.constant 0 : index
    %1 = vector.load %arg2[%c0_1, %c0_2] : memref<16x128xf32, #tpu.memory_space<vmem>>, vector<16x128xf32>
    %cst = arith.constant dense<0.000000e+00> : vector<8x128xf32>
    %2 = tpu.matmul %0, %1, %cst {dimension_numbers = #tpu.dot_dimension_numbers<[1], [0], [0], [1], [0, 0, 1, 1], [], []>, precision = #tpu.contract_precision<fp32>} : vector<8x16xf32>, vector<16x128xf32>, vector<8x128xf32> -> vector<8x128xf32>
    %c0_3 = arith.constant 0 : index
    %c0_4 = arith.constant 0 : index
    %3 = vector.load %arg3[%c0_3, %c0_4] : memref<1x128xf32, #tpu.memory_space<vmem>>, vector<1x128xf32>
    %4 = vector.broadcast %3 : vector<1x128xf32> to vector<8x128xf32>
    %5 = arith.addf %2, %4 : vector<8x128xf32>
    %6 = math.sin %5 : vector<8x128xf32>
    %c0_5 = arith.constant 0 : index
    %c0_6 = arith.constant 0 : index
    %7 = vector.load %arg4[%c0_5, %c0_6] : memref<8x128xf32, #tpu.memory_space<vmem>>, vector<8x128xf32>
    tpu.vector_store %arg4[%c0_5, %c0_6], %6 {strides = array<i32>} : memref<8x128xf32, #tpu.memory_space<vmem>>, vector<8x128xf32>,
    return
  }
  func.func @transform_0(%arg0: i32) -> (i32, i32) {
    %c0_i32 = arith.constant 0 : i32
    %c0_i32_0 = arith.constant 0 : i32
    return %arg0, %c0_i32 : i32, i32
  }
  func.func @transform_1(%arg0: i32) -> (i32, i32) {
    %c0_i32 = arith.constant 0 : i32
    %c0_i32_0 = arith.constant 0 : i32
    %c0_i32_1 = arith.constant 0 : i32
    return %c0_i32, %c0_i32_0 : i32, i32
  }
  func.func @transform_2(%arg0: i32) -> (i32, i32) {
    %c0_i32 = arith.constant 0 : i32
    %c0_i32_0 = arith.constant 0 : i32
    %c0_i32_1 = arith.constant 0 : i32
    return %c0_i32, %c0_i32_0 : i32, i32
  }
  func.func @transform_3(%arg0: i32) -> (i32, i32) {
    %c0_i32 = arith.constant 0 : i32
    %c0_i32_0 = arith.constant 0 : i32
    return %arg0, %c0_i32 : i32, i32
  }
}

</mosaic_0001>

<llo_original>
// kernel: tpu_custom_call.1
$region0: #{tpu_custom_call.1}
  #allocation0 [shape = 'u32[]', space=smem, size = 0x4, offset = 0x4, fixed_abs, tag = 'smem constant byte address 0x4 - core index']
  #allocation1 [shape = 'u32[72,128]{1,0:T(1,128)}', space=vmem, size = 0x9000, scoped, tag = 'internal scratch']
  %s0 = inlined_call_operand.hbm [shape: f32[8,16], index: 0, kind: input, shape index: {}]
  %s1 = inlined_call_operand.hbm [shape: f32[16,128], index: 1, kind: input, shape index: {}]
  %s2 = inlined_call_operand.vmem [shape: f32[1,128], index: 2, kind: input, shape index: {}]
  %s3 = inlined_call_operand.hbm [shape: f32[8,128], index: 3, kind: output, shape index: {}]
  %s4 = sld [smem:[#allocation0]]
  $region30: #{tpu_custom_call.1} parent=0
    _
  %s6 = ssub.s32 1, %s4
  %s7 = scalar_select 0, %s6, %s4
  $region1: #{tpu_custom_call.1} parent=0
    #allocation2 [shape = 'u8[4096]{0}', space=vmem, size = 0x1000, scoped, tag = 'input window, operand 0, single buffered']
    #allocation3 [shape = 's32[1]{0}', space=sflag, size = 0x4, scoped, tag = 'scoped memory for tpu_custom_call.1']
    #allocation4 [shape = 's32[1]{0}', space=sflag, size = 0x4, scoped, tag = 'scoped memory for tpu_custom_call.1']
    #allocation5 [shape = 'u8[8192]{0}', space=vmem, size = 0x2000, scoped, tag = 'input window, operand 1, single buffered']
    #allocation6 [shape = 's32[1]{0}', space=sflag, size = 0x4, scoped, tag = 'scoped memory for tpu_custom_call.1']
    #allocation7 [shape = 'u8[4096]{0}', space=vmem, size = 0x1000, scoped, tag = 'output window, operand 0, single buffered']
    %8 = vsyncpa [#allocation3], 0
    %9 = vsyncpa [#allocation6], 0
    %10 = vsyncpa [#allocation4], 0
    // Predicated region
    $region2: #{tpu_custom_call.1} parent=1 // pred_check
      _
    $region3: #{tpu_custom_call.1} parent=1 // pred_check_branch
      %12 = sbr.rel (0) target = $region5
    $region4: #{tpu_custom_call.1} parent=1 // pred_region
      %14 = vsyncadd [#allocation3], 0
      %s16 = sshll.u32 %s0, 4
      %s17 = int_to_ptr.hbm [resolvable:$true] %s16
      %s18 = sshll.u32 [#allocation2], 4
      %s19 = int_to_ptr.vmem [resolvable:$true] %s18
      %21 = dma.hbm_to_vmem [thread:$0]  %s17, 128, %s19, [#allocation3]
    $region5: #{tpu_custom_call.1} parent=1 // pred_fallthru
      _
    // Predicated region
    $region6: #{tpu_custom_call.1} parent=1 // pred_check
      _
    $region7: #{tpu_custom_call.1} parent=1 // pred_check_branch
      %23 = sbr.rel (0) target = $region9
    $region8: #{tpu_custom_call.1} parent=1 // pred_region
      %25 = vsyncadd [#allocation6], 0
      %s26 = sshll.u32 %s1, 4
      %s27 = int_to_ptr.hbm [resolvable:$true] %s26
      %s28 = sshll.u32 [#allocation5], 4
      %s29 = int_to_ptr.vmem [resolvable:$true] %s28
      %34 = dma.hbm_to_vmem [thread:$0]  %s27, 256, %s29, [#allocation6], 128, 128, 8
    $region9: #{tpu_custom_call.1} parent=1 // pred_fallthru
      _
    // Predicated region
    $region10: #{tpu_custom_call.1} parent=1 // pred_check
      _
    $region11: #{tpu_custom_call.1} parent=1 // pred_check_branch
      %36 = sbr.rel (0) target = $region13
    $region12: #{tpu_custom_call.1} parent=1 // pred_region
      _
    $region13: #{tpu_custom_call.1} parent=1 // pred_fallthru
      _
    // Predicated region
    $region14: #{tpu_custom_call.1} parent=1 // pred_check
      _
    $region15: #{tpu_custom_call.1} parent=1 // pred_check_branch
      %38 = sbr.rel (0) target = $region17
    $region16: #{tpu_custom_call.1} parent=1 // pred_region
      %40 = dma.done [#allocation3], 128
    $region17: #{tpu_custom_call.1} parent=1 // pred_fallthru
      _
    // Predicated region
    $region18: #{tpu_custom_call.1} parent=1 // pred_check
      _
    $region19: #{tpu_custom_call.1} parent=1 // pred_check_branch
      %42 = sbr.rel (0) target = $region21
    $region20: #{tpu_custom_call.1} parent=1 // pred_region
      %44 = dma.done [#allocation6], 256
    $region21: #{tpu_custom_call.1} parent=1 // pred_fallthru
      _
    %v45 = vld [vmem:[#allocation2] sm:$0xff]
    %v46 = vld [vmem:[#allocation5] sm:$0xff]
    %v47 = vld [vmem:[#allocation5 + $0x8] sm:$0xff]
    %v48 = vld [vmem:[%s2] sm:$0x1]
    %v50 = vperm.slane %v48, 0
    %vm52 = vcmask 130048
    %v54 = vsel %vm52, %v45, 0
    %56 = vmatpush.msra.mxu0 0.0
    %57 = vmatpush.msra.mxu0 0.0
    %58 = vmatpush.msra.mxu0 0.0
    %59 = vmatpush.msra.mxu0 0.0
    %60 = vmatpush.msra.mxu0 0.0
    %61 = vmatpush.msra.mxu0 0.0
    %62 = vmatpush.msra.mxu0 0.0
    %63 = vmatpush.msra.mxu0 0.0
    %64 = vmatpush.msra.mxu0 0.0
    %65 = vmatpush.msra.mxu0 0.0
    %66 = vmatpush.msra.mxu0 0.0
    %67 = vmatpush.msra.mxu0 0.0
    %68 = vmatpush.msra.mxu0 0.0
    %69 = vmatpush.msra.mxu0 0.0
    %v70 = vand.u32 %v47, 4294901760
    %71 = vmatpush.msra.mxu0 %v70
    %v72 = vand.u32 %v46, 4294901760
    %73 = vmatpush.msra.mxu0 %v72
    %v74 = vand.u32 %v54, 4294901760
    %v75 = vsub.f32 %v54, %v74
    %v76 = vand.u32 %v75, 4294901760
    %v77 = vsub.f32 %v75, %v76
    %v78 = vand.u32 %v77, 4294901760
    %79 = vmatmul.f32.gmra.mxu0 %v78
    %v80 = vpop.f32.mrf.mxu0
    %v81 = vadd.f32 %v50, %v80
    %82 = vdwg.mxu0
    %83 = vmatpush.msra.mxu0 0.0
    %84 = vmatpush.msra.mxu0 0.0
    %85 = vmatpush.msra.mxu0 0.0
    %86 = vmatpush.msra.mxu0 0.0
    %87 = vmatpush.msra.mxu0 0.0
    %88 = vmatpush.msra.mxu0 0.0
    %89 = vmatpush.msra.mxu0 0.0
    %90 = vmatpush.msra.mxu0 0.0
    %91 = vmatpush.msra.mxu0 0.0
    %92 = vmatpush.msra.mxu0 0.0
    %93 = vmatpush.msra.mxu0 0.0
    %94 = vmatpush.msra.mxu0 0.0
    %95 = vmatpush.msra.mxu0 0.0
    %96 = vmatpush.msra.mxu0 0.0
    %v97 = vand.u32 %v47, 4294901760
    %v98 = vsub.f32 %v47, %v97
    %v99 = vand.u32 %v98, 4294901760
    %v100 = vsub.f32 %v98, %v99
    %v101 = vand.u32 %v100, 4294901760
    %102 = vmatpush.msra.mxu0 %v101
    %v103 = vand.u32 %v46, 4294901760
    %v104 = vsub.f32 %v46, %v103
    %v105 = vand.u32 %v104, 4294901760
    %v106 = vsub.f32 %v104, %v105
    %v107 = vand.u32 %v106, 4294901760
    %108 = vmatpush.msra.mxu0 %v107
    %v109 = vand.u32 %v54, 4294901760
    %110 = vmatmul.f32.gmra.mxu0 %v109
    %v111 = vpop.f32.mrf.mxu0
    %v112 = vadd.f32 %v81, %v111
    %113 = vdwg.mxu0
    %114 = vmatpush.msra.mxu0 0.0
    %115 = vmatpush.msra.mxu0 0.0
    %116 = vmatpush.msra.mxu0 0.0
    %117 = vmatpush.msra.mxu0 0.0
    %118 = vmatpush.msra.mxu0 0.0
    %119 = vmatpush.msra.mxu0 0.0
    %120 = vmatpush.msra.mxu0 0.0
    %121 = vmatpush.msra.mxu0 0.0
    %122 = vmatpush.msra.mxu0 0.0
    %123 = vmatpush.msra.mxu0 0.0
    %124 = vmatpush.msra.mxu0 0.0
    %125 = vmatpush.msra.mxu0 0.0
    %126 = vmatpush.msra.mxu0 0.0
    %127 = vmatpush.msra.mxu0 0.0
    %v128 = vand.u32 %v47, 4294901760
    %v129 = vsub.f32 %v47, %v128
    %130 = vmatpush.msra.mxu0 %v129
    %v131 = vand.u32 %v46, 4294901760
    %v132 = vsub.f32 %v46, %v131
    %133 = vmatpush.msra.mxu0 %v132
    %v134 = vand.u32 %v54, 4294901760
    %v135 = vsub.f32 %v54, %v134
    %136 = vmatmul.f32.gmra.mxu0 %v135
    %v137 = vpop.f32.mrf.mxu0
    %v138 = vadd.f32 %v112, %v137
    %139 = vdwg.mxu0
    %140 = vmatpush.msra.mxu0 0.0
    %141 = vmatpush.msra.mxu0 0.0
    %142 = vmatpush.msra.mxu0 0.0
    %143 = vmatpush.msra.mxu0 0.0
    %144 = vmatpush.msra.mxu0 0.0
    %145 = vmatpush.msra.mxu0 0.0
    %146 = vmatpush.msra.mxu0 0.0
    %147 = vmatpush.msra.mxu0 0.0
    %148 = vmatpush.msra.mxu0 0.0
    %149 = vmatpush.msra.mxu0 0.0
    %150 = vmatpush.msra.mxu0 0.0
    %151 = vmatpush.msra.mxu0 0.0
    %152 = vmatpush.msra.mxu0 0.0
    %153 = vmatpush.msra.mxu0 0.0
    %v154 = vand.u32 %v47, 4294901760
    %155 = vmatpush.msra.mxu0 %v154
    %v156 = vand.u32 %v46, 4294901760
    %157 = vmatpush.msra.mxu0 %v156
    %v158 = vand.u32 %v54, 4294901760
    %v159 = vsub.f32 %v54, %v158
    %v160 = vand.u32 %v159, 4294901760
    %161 = vmatmul.f32.gmra.mxu0 %v160
    %v162 = vpop.f32.mrf.mxu0
    %v163 = vadd.f32 %v138, %v162
    %164 = vdwg.mxu0
    %165 = vmatpush.msra.mxu0 0.0
    %166 = vmatpush.msra.mxu0 0.0
    %167 = vmatpush.msra.mxu0 0.0
    %168 = vmatpush.msra.mxu0 0.0
    %169 = vmatpush.msra.mxu0 0.0
    %170 = vmatpush.msra.mxu0 0.0
    %171 = vmatpush.msra.mxu0 0.0
    %172 = vmatpush.msra.mxu0 0.0
    %173 = vmatpush.msra.mxu0 0.0
    %174 = vmatpush.msra.mxu0 0.0
    %175 = vmatpush.msra.mxu0 0.0
    %176 = vmatpush.msra.mxu0 0.0
    %177 = vmatpush.msra.mxu0 0.0
    %178 = vmatpush.msra.mxu0 0.0
    %v179 = vand.u32 %v47, 4294901760
    %v180 = vsub.f32 %v47, %v179
    %v181 = vand.u32 %v180, 4294901760
    %182 = vmatpush.msra.mxu0 %v181
    %v183 = vand.u32 %v46, 4294901760
    %v184 = vsub.f32 %v46, %v183
    %v185 = vand.u32 %v184, 4294901760
    %186 = vmatpush.msra.mxu0 %v185
    %v187 = vand.u32 %v54, 4294901760
    %188 = vmatmul.f32.gmra.mxu0 %v187
    %v189 = vpop.f32.mrf.mxu0
    %v190 = vadd.f32 %v163, %v189
    %191 = vdwg.mxu0
    %192 = vmatpush.msra.mxu0 0.0
    %193 = vmatpush.msra.mxu0 0.0
    %194 = vmatpush.msra.mxu0 0.0
    %195 = vmatpush.msra.mxu0 0.0
    %196 = vmatpush.msra.mxu0 0.0
    %197 = vmatpush.msra.mxu0 0.0
    %198 = vmatpush.msra.mxu0 0.0
    %199 = vmatpush.msra.mxu0 0.0
    %200 = vmatpush.msra.mxu0 0.0
    %201 = vmatpush.msra.mxu0 0.0
    %202 = vmatpush.msra.mxu0 0.0
    %203 = vmatpush.msra.mxu0 0.0
    %204 = vmatpush.msra.mxu0 0.0
    %205 = vmatpush.msra.mxu0 0.0
    %v206 = vand.u32 %v47, 4294901760
    %207 = vmatpush.msra.mxu0 %v206
    %v208 = vand.u32 %v46, 4294901760
    %209 = vmatpush.msra.mxu0 %v208
    %v210 = vand.u32 %v54, 4294901760
    %211 = vmatmul.f32.gmra.mxu0 %v210
    %v212 = vpop.f32.mrf.mxu0
    %v213 = vadd.f32 %v190, %v212
    %214 = vdwg.mxu0
    %v215 = vand.u32 2147483647, %v213
    %vm216 = vcmp.le.f32.partialorder %v215, 0.7853982
    %vm217 = vcmp.lt.s32.totalorder %v213, 0
    %v218 = vand.u32 %v213, 2139095040
    %v219 = vshrl.u32 %v218, 23
    %v220 = vsub.s32 %v219, 127
    %v221 = vand.u32 2147483647, %v213
    %v222 = vand.u32 %v221, 8388607
    %v223 = vor.u32 %v222, 8388608
    %v224 = vsub.s32 0, %v223
    %v225 = vadd.s32 %v220, 1
    %vm226 = vcmp.gt.s32.totalorder %v225, 0
    %v227 = vsel %vm226, %v225, 0
    %v228 = vshrl.u32 %v227, 5
    %v229 = vand.u32 %v227, 31
    %v230 = vsub.s32 32, %v229
    %v231 = vshrl.u32 683565275, %v230
    %v232 = vshll.u32 683565275, %v229
    %v233 = vshrl.u32 2475754826, %v230
    %v234 = vor.u32 %v232, %v233
    %v235 = vshll.u32 2475754826, %v229
    %v236 = vshrl.u32 2131351028, %v230
    %v237 = vor.u32 %v235, %v236
    %v238 = vshll.u32 2131351028, %v229
    %v239 = vshrl.u32 2102212464, %v230
    %v240 = vor.u32 %v238, %v239
    %v241 = vshll.u32 2102212464, %v229
    %v242 = vshrl.u32 920167782, %v230
    %v243 = vor.u32 %v241, %v242
    %v244 = vshll.u32 920167782, %v229
    %v245 = vshrl.u32 1326507024, %v230
    %v246 = vor.u32 %v244, %v245
    %vm247 = vcmp.lt.s32.totalorder %v228, 1
    %vm248 = vcmp.lt.s32.totalorder %v228, 2
    %vm249 = vcmp.lt.s32.totalorder %v228, 3
    %vm250 = vcmp.lt.s32.totalorder %v228, 4
    %v251 = vsel %vm247, %v231, %v234
    %v252 = vsel %vm250, %v240, 2102212464
    %v253 = vsel %vm249, %v237, %v252
    %v254 = vsel %vm248, %v251, %v253
    %v255 = vsel %vm247, %v234, %v237
    %v256 = vsel %vm250, %v243, 920167782
    %v257 = vsel %vm249, %v240, %v256
    %v258 = vsel %vm248, %v255, %v257
    %v259 = vsel %vm247, %v237, %v240
    %v260 = vsel %vm250, %v246, 1326507024
    %v261 = vsel %vm249, %v243, %v260
    %v262 = vsel %vm248, %v259, %v261
    %v263 = vshll.u32 %v223, 8
    %v264 = vand.u32 %v263, 65535
    %v265 = vshrl.u32 %v263, 16
    %v266 = vand.u32 %v262, 65535
    %v267 = vshrl.u32 %v262, 16
    %v268 = vmul.u32 %v264, %v266
    %v269 = vmul.u32 %v264, %v267
    %v270 = vmul.u32 %v265, %v266
    %v271 = vmul.u32 %v265, %v267
    %v272 = vshll.u32 %v269, 16
    %v273 = vshrl.u32 %v269, 16
    %v274 = vshll.u32 %v270, 16
    %v275 = vshrl.u32 %v270, 16
    %vm276 = vc.u32 %v268, %v272
    %v277 = vsel %vm276, 1, 0
    %v278 = vadd.s32 %v268, %v272
    %v279 = vadd.s32 %v271, %v277
    %vm280 = vc.u32 %v278, %v274
    %v281 = vsel %vm280, 1, 0
    %v282 = vadd.s32 %v278, %v274
    %v283 = vadd.s32 %v279, %v281
    %v284 = vadd.s32 %v283, %v273
    %v285 = vadd.s32 %v284, %v275
    %v286 = vand.u32 %v263, 65535
    %v287 = vshrl.u32 %v263, 16
    %v288 = vand.u32 %v258, 65535
    %v289 = vshrl.u32 %v258, 16
    %v290 = vmul.u32 %v286, %v288
    %v291 = vmul.u32 %v286, %v289
    %v292 = vmul.u32 %v287, %v288
    %v293 = vmul.u32 %v287, %v289
    %v294 = vshll.u32 %v291, 16
    %v295 = vshrl.u32 %v291, 16
    %v296 = vshll.u32 %v292, 16
    %v297 = vshrl.u32 %v292, 16
    %vm298 = vc.u32 %v290, %v294
    %v299 = vsel %vm298, 1, 0
    %v300 = vadd.s32 %v290, %v294
    %v301 = vadd.s32 %v293, %v299
    %vm302 = vc.u32 %v300, %v296
    %v303 = vsel %vm302, 1, 0
    %v304 = vadd.s32 %v300, %v296
    %v305 = vadd.s32 %v301, %v303
    %v306 = vadd.s32 %v305, %v295
    %v307 = vadd.s32 %v306, %v297
    %v308 = vmul.u32 %v263, %v254
    %v309 = vadd.s32 %v285, %v304
    %vm310 = vc.u32 %v285, %v304
    %v311 = vadd.s32 %v307, 1
    %v312 = vsel %vm310, %v311, %v307
    %v313 = vadd.s32 %v308, %v312
    %v314 = vadd.s32 %v313, 536870912
    %v315 = vshrl.u32 %v314, 30
    %v316 = vshll.u32 %v315, 30
    %v317 = vsub.s32 %v313, %v316
    %vm318 = vcmp.lt.s32.totalorder %v317, 0
    %v319 = vsub.s32 0, %v317
    %v320 = vsel %vm318, %v319, %v317
    %v321 = vclz %v320
    %v322 = vsub.s32 %v321, 2
    %vm323 = vcmp.gt.s32.totalorder 0, %v322
    %v324 = vsel %vm323, 0, %v322
    %v325 = vsub.s32 32, %v324
    %v326 = vshll.u32 %v317, %v324
    %v327 = vshrl.u32 %v309, %v325
    %v328 = vor.u32 %v326, %v327
    %v329 = vsub.s32 4294967266, %v324
    %v330 = vadd.s32 %v329, 127
    %v331 = vshll.u32 %v330, 23
    %v332 = vor.u32 4788187, %v331
    %v333 = vand.u32 2147483647, %v332
    %v335 = vcvt.s32.f32 %v328
    %v336 = vmul.f32 %v335, %v333
    %v337 = vxor.u32 %v336, 2147483648
    %v338 = vsel %vm217, %v337, %v336
    %v339 = vsub.s32 4, %v315
    %v340 = vsel %vm217, %v339, %v315
    %v341 = vsel %vm216, %v213, %v338
    %v342 = vsel %vm216, 0, %v340
    %v343 = vmul.f32 %v341, %v341
    %v344 = vmul.f32 %v343, -0.001358992
    %v345 = vadd.f32 %v344, 0.041655596
    %v346 = vmul.f32 %v343, %v345
    %v347 = vadd.f32 %v346, -0.4999988
    %v348 = vmul.f32 %v343, %v347
    %v349 = vadd.f32 1.0, %v348
    %v350 = vmul.f32 %v341, %v341
    %v351 = vmul.f32 %v350, -0.00019511016
    %v352 = vadd.f32 %v351, 0.008332121
    %v353 = vmul.f32 %v350, %v352
    %v354 = vadd.f32 %v353, -0.16666654
    %v355 = vmul.f32 %v350, %v354
    %v356 = vadd.f32 %v355, 1.0
    %v357 = vmul.f32 %v356, %v341
    %vm358 = vweird.f32 %v213
    %v359 = vadd.s32 %v342, 3
    %v360 = vand.u32 %v359, 3
    %vm361 = vcmp.lt.s32.totalorder %v360, 2
    %vm362 = vcmp.eq.s32.totalorder %v360, 0
    %v363 = vxor.u32 %v357, 2147483648
    %v364 = vsel %vm362, %v349, %v363
    %vm365 = vcmp.eq.s32.totalorder %v360, 2
    %v366 = vxor.u32 %v349, 2147483648
    %v367 = vsel %vm365, %v366, %v357
    %v368 = vsel %vm361, %v364, %v367
    %v369 = vsel %vm358, nan, %v368
    %370 = vst [vmem:[#allocation7] sm:$0xff] %v369
    // Predicated region
    $region22: #{tpu_custom_call.1} parent=1 // pred_check
      _
    $region23: #{tpu_custom_call.1} parent=1 // pred_check_branch
      %372 = sbr.rel (0) target = $region25
    $region24: #{tpu_custom_call.1} parent=1 // pred_region
      %374 = vsyncadd [#allocation4], 0
      %s376 = sshll.u32 [#allocation7], 4
      %s377 = int_to_ptr.vmem [resolvable:$true] %s376
      %s378 = sshll.u32 %s3, 4
      %s379 = int_to_ptr.hbm [resolvable:$true] %s378
      %381 = dma.vmem_to_hbm [thread:$0]  %s377, 128, %s379, [#allocation4]
    $region25: #{tpu_custom_call.1} parent=1 // pred_fallthru
      _
    // Predicated region
    $region26: #{tpu_custom_call.1} parent=1 // pred_check
      _
    $region27: #{tpu_custom_call.1} parent=1 // pred_check_branch
      %383 = sbr.rel (0) target = $region29
    $region28: #{tpu_custom_call.1} parent=1 // pred_region
      %385 = dma.done [#allocation4], 128
    $region29: #{tpu_custom_call.1} parent=1 // pred_fallthru
      _
    %386 = vsyncpa [#allocation3], 1
    %387 = vsyncpa [#allocation6], 1
    %388 = vsyncpa [#allocation4], 1

</llo_original>
